<compile_context>
chip_gen: v6e
topology: v6e:2x2x1
jax: 0.10.0
libtpu: 0.0.40
codegen_flags: <defaults>
</compile_context>

<pallas_src>
import numpy as np
import jax
import jax.numpy as jnp
from jax.experimental import pallas as pl
from jax.experimental.pallas import tpu as pltpu

_EPS = 1e-5        # BatchNorm eps (PyTorch default)
_LANE = 128        # TPU lane width


def _vmem_limit_bytes():
    """Chip-aware scoped-VMEM budget: large on 128 MiB v5e/v6e, conservative
    on 64 MiB v7x, safe 32 MiB fallback if the query is unavailable."""
    try:
        cap = getattr(pltpu.get_tpu_info(), "vmem_capacity_bytes", None)
        if cap:
            return int(min(max(cap * 3 // 4, 32 << 20), 96 << 20))
    except Exception:
        pass
    return 32 << 20


_VMEM_LIMIT = _vmem_limit_bytes()


def _pad_to_lane(c):
    return ((c + _LANE - 1) // _LANE) * _LANE


def _pick_m_tile(m, bytes_per_row):
    """Largest M tile that (a) divides M, (b) leaves >= 2 grid steps so the
    BlockSpec pipeline overlaps DMA with compute, and (c) keeps the
    double-buffered working set comfortably inside the scoped VMEM budget."""
    cap = max(8, (_VMEM_LIMIT // 4) // max(2 * bytes_per_row, 1))
    for t in (4096, 2048, 1024, 512, 256, 128, 64, 32, 16, 8):
        if t <= cap and m % t == 0 and m // t >= 2:
            return t
    return m


# --------------------------------------------------------------------------- #
# Stage 1: 1x1 conv (matmul) + per-tile partial BN stats.  Fully "parallel".
# (Conv bias dropped: it is absorbed exactly by the following BatchNorm.)
# --------------------------------------------------------------------------- #
def _mm_stats_kernel(x_ref, w_ref, y_ref, s1_ref, s2_ref):
    y = jnp.dot(x_ref[...], w_ref[...], preferred_element_type=jnp.float32)
    y_ref[...] = y.astype(y_ref.dtype)
    s1_ref[0] = jnp.sum(y, axis=0, keepdims=True)
    s2_ref[0] = jnp.sum(y * y, axis=0, keepdims=True)


def matmul_stats(x_bf16, w_bf16):
    M, K = x_bf16.shape
    C = w_bf16.shape[1]
    tm = _pick_m_tile(M, (K + C) * 2 + C * 4)
    g = M // tm
    # TODO(synk): single-buffer the constant weight block (pl.Buffered(1)) for
    # very wide channels on v7x's 64 MiB VMEM.
    return pl.pallas_call(
        _mm_stats_kernel,
        out_shape=(jax.ShapeDtypeStruct((M, C), jnp.bfloat16),
                   jax.ShapeDtypeStruct((g, 1, C), jnp.float32),
                   jax.ShapeDtypeStruct((g, 1, C), jnp.float32)),
        grid=(g,),
        in_specs=[pl.BlockSpec((tm, K), lambda i: (i, 0)),
                  pl.BlockSpec((K, C), lambda i: (0, 0))],
        out_specs=(pl.BlockSpec((tm, C), lambda i: (i, 0)),
                   pl.BlockSpec((1, 1, C), lambda i: (i, 0, 0)),
                   pl.BlockSpec((1, 1, C), lambda i: (i, 0, 0))),
        compiler_params=pltpu.CompilerParams(
            dimension_semantics=("parallel",),
            vmem_limit_bytes=_VMEM_LIMIT),
    )(x_bf16, w_bf16)


# --------------------------------------------------------------------------- #
# Stage 3: fused (BN2 apply + ReLU) -> 1x1 conv matmul -> partial BN stats.
# Removes a full (M, Cb) HBM read + write compared to a separate bn_apply pass.
# --------------------------------------------------------------------------- #
def _bn_mm_stats_kernel(y_ref, sc_ref, sh_ref, w_ref, o_ref, s1_ref, s2_ref):
    a = jnp.maximum(
        y_ref[...].astype(jnp.float32) * sc_ref[...] + sh_ref[...], 0.0)
    y = jnp.dot(a.astype(jnp.bfloat16), w_ref[...],
                preferred_element_type=jnp.float32)
    o_ref[...] = y.astype(o_ref.dtype)
    s1_ref[0] = jnp.sum(y, axis=0, keepdims=True)
    s2_ref[0] = jnp.sum(y * y, axis=0, keepdims=True)


def bn_relu_matmul_stats(y_prev, scale, shift, w_bf16):
    M, K = y_prev.shape
    C = w_bf16.shape[1]
    tm = _pick_m_tile(M, (K + C) * 2 + (K + C) * 4)
    g = M // tm
    return pl.pallas_call(
        _bn_mm_stats_kernel,
        out_shape=(jax.ShapeDtypeStruct((M, C), jnp.bfloat16),
                   jax.ShapeDtypeStruct((g, 1, C), jnp.float32),
                   jax.ShapeDtypeStruct((g, 1, C), jnp.float32)),
        grid=(g,),
        in_specs=[pl.BlockSpec((tm, K), lambda i: (i, 0)),
                  pl.BlockSpec((1, K), lambda i: (0, 0)),
                  pl.BlockSpec((1, K), lambda i: (0, 0)),
                  pl.BlockSpec((K, C), lambda i: (0, 0))],
        out_specs=(pl.BlockSpec((tm, C), lambda i: (i, 0)),
                   pl.BlockSpec((1, 1, C), lambda i: (i, 0, 0)),
                   pl.BlockSpec((1, 1, C), lambda i: (i, 0, 0))),
        compiler_params=pltpu.CompilerParams(
            dimension_semantics=("parallel",),
            vmem_limit_bytes=_VMEM_LIMIT),
    )(y_prev, scale, shift, w_bf16)


# --------------------------------------------------------------------------- #
# Stage 2: fused (BN1 apply + ReLU) -> grouped 3x3 conv -> partial BN stats.
# The zero halo and the im2col patch live in VMEM scratch; nothing extra hits
# HBM.  The 9 taps are concatenated along K and contracted with one fat-K
# matmul (K = 9*Cb) per batch element.
# --------------------------------------------------------------------------- #
def grouped_conv3x3_stats(y1_nhwc, scale1, shift1, w_im2col, H, W):
    N = y1_nhwc.shape[0]
    Cb = y1_nhwc.shape[-1]
    HW = H * W

    def kernel(y1_ref, sc_ref, sh_ref, w_ref, y2_ref, s1_ref, s2_ref,
               pad_ref, patch_ref):
        # fused stage-1 BN apply + ReLU (no a1 HBM round trip)
        a = jnp.maximum(
            y1_ref[0].astype(jnp.float32) * sc_ref[...] + sh_ref[...], 0.0)
        # zero-padded halo built in VMEM (replaces the wrapper-side jnp.pad)
        pad_ref[...] = jnp.zeros_like(pad_ref)
        pad_ref[1:H + 1, 1:W + 1, :] = a
        # in-VMEM im2col: tap t -> lane block t of the patch scratch
        for t in range(9):
            ky, kx = divmod(t, 3)
            patch_ref[:, t * Cb:(t + 1) * Cb] = (
                pad_ref[ky:ky + H, kx:kx + W, :]
                .reshape(HW, Cb).astype(jnp.bfloat16))
        # single fat-K matmul (K = 9*Cb) -> better v6e/v7x MXU utilization
        y = jnp.dot(patch_ref[...], w_ref[...],
                    preferred_element_type=jnp.float32)
        y2_ref[0] = y.astype(y2_ref.dtype)
        s1_ref[0] = jnp.sum(y, axis=0, keepdims=True)
        s2_ref[0] = jnp.sum(y * y, axis=0, keepdims=True)

    # TODO(synk): add an H-tile grid axis with a 1-row halo DMA for very large
    # spatial planes / Cb >= 256 so the per-image block stays inside v7x VMEM.
    # TODO(synk): per-group (128-lane) output tiling instead of the dense
    # block-diagonal tap matrix once the padded width exceeds one lane tile.
    return pl.pallas_call(
        kernel,
        out_shape=(jax.ShapeDtypeStruct((N, HW, Cb), jnp.bfloat16),
                   jax.ShapeDtypeStruct((N, 1, Cb), jnp.float32),
                   jax.ShapeDtypeStruct((N, 1, Cb), jnp.float32)),
        grid=(N,),
        in_specs=[pl.BlockSpec((1, H, W, Cb), lambda n: (n, 0, 0, 0)),
                  pl.BlockSpec((1, Cb), lambda n: (0, 0)),
                  pl.BlockSpec((1, Cb), lambda n: (0, 0)),
                  pl.BlockSpec((9 * Cb, Cb), lambda n: (0, 0))],
        out_specs=(pl.BlockSpec((1, HW, Cb), lambda n: (n, 0, 0)),
                   pl.BlockSpec((1, 1, Cb), lambda n: (n, 0, 0)),
                   pl.BlockSpec((1, 1, Cb), lambda n: (n, 0, 0))),
        scratch_shapes=[pltpu.VMEM((H + 2, W + 2, Cb), jnp.float32),
                        pltpu.VMEM((HW, 9 * Cb), jnp.bfloat16)],
        compiler_params=pltpu.CompilerParams(
            dimension_semantics=("parallel",),
            vmem_limit_bytes=_VMEM_LIMIT),
    )(y1_nhwc, scale1, shift1, w_im2col)


# --------------------------------------------------------------------------- #
# Epilogue: BN3 apply + identity shortcut (bf16 residual) + ReLU, M-tiled.
# --------------------------------------------------------------------------- #
def _bn_res_relu_kernel(y_ref, sc_ref, sh_ref, r_ref, o_ref):
    v = (y_ref[...].astype(jnp.float32) * sc_ref[...] + sh_ref[...]
         + r_ref[...].astype(jnp.float32))
    o_ref[...] = jnp.maximum(v, 0.0).astype(o_ref.dtype)


def bn_residual_relu(y, scale, shift, res, out_dtype=jnp.float32):
    M, C = y.shape
    tm = _pick_m_tile(M, 2 * C * 2 + C * 4)
    return pl.pallas_call(
        _bn_res_relu_kernel,
        out_shape=jax.ShapeDtypeStruct((M, C), out_dtype),
        grid=(M // tm,),
        in_specs=[pl.BlockSpec((tm, C), lambda i: (i, 0)),
                  pl.BlockSpec((1, C), lambda i: (0, 0)),
                  pl.BlockSpec((1, C), lambda i: (0, 0)),
                  pl.BlockSpec((tm, C), lambda i: (i, 0))],
        out_specs=pl.BlockSpec((tm, C), lambda i: (i, 0)),
        compiler_params=pltpu.CompilerParams(
            dimension_semantics=("parallel",),
            vmem_limit_bytes=_VMEM_LIMIT),
    )(y, scale, shift, res)


def _bn_scale_shift(s1_part, s2_part, m, gamma_p, beta_p):
    """Reduce per-tile partial sums (tiny) and fold BN into scale/shift."""
    # TODO(synk): one-pass E[y^2]-E[y]^2 can cancel when |mean| >> std; use a
    # per-channel pivot / Welford update for production activation stats.
    s1 = jnp.sum(s1_part, axis=(0, 1))
    s2 = jnp.sum(s2_part, axis=(0, 1))
    mean = s1 / m
    var = jnp.maximum(s2 / m - mean * mean, 0.0)
    scale = gamma_p * jax.lax.rsqrt(var + _EPS)
    shift = beta_p - mean * scale
    return scale.reshape(1, -1), shift.reshape(1, -1)


# ------------------------- parameters / glue (JAX) ------------------------- #
def init_params(key, in_channels, out_channels, groups, bottleneck_multiplier=1):
    bot = int(round(out_channels * bottleneck_multiplier))
    assert in_channels % groups == 0 and out_channels % groups == 0
    conv2_groups = bot // groups  # nn.Conv2d(..., groups=bot_channels // groups)
    ks = jax.random.split(key, 12)

    def rn(k, shape, scale=0.1):
        return scale * jax.random.normal(k, shape, jnp.float32)

    p = dict(
        w1=rn(ks[0], (bot, in_channels, 1, 1)),
        b1=rn(ks[1], (bot,)),
        w2=rn(ks[2], (bot, bot // conv2_groups, 3, 3)),
        b2=rn(ks[3], (bot,)),
        w3=rn(ks[4], (out_channels, bot, 1, 1)),
        b3=rn(ks[5], (out_channels,)),
        g1=1.0 + rn(ks[6], (out_channels,)),
        be1=rn(ks[7], (out_channels,)),
        g2=1.0 + rn(ks[8], (out_channels,)),
        be2=rn(ks[9], (out_channels,)),
        g3=1.0 + rn(ks[10], (out_channels,)),
        be3=rn(ks[11], (out_channels,)),
    )
    p["bot"] = bot
    p["conv2_groups"] = conv2_groups
    return p


def grouped_conv_weight_to_im2col(w2, conv2_groups, c_pad):
    """(Cout, Cin_per_group, 3, 3) grouped-conv weight -> (9*c_pad, c_pad)
    block-diagonal dense im2col matrix, zero-padded to the lane width, with
    row block t = tap t (matching the in-kernel patch layout)."""
    w2 = np.asarray(w2)
    bot, cin_pg, kh, kw = w2.shape
    cout_pg = bot // conv2_groups
    taps = np.zeros((kh * kw, c_pad, c_pad), np.float32)
    for co in range(bot):
        g = co // cout_pg
        for cil in range(cin_pg):
            ci = g * cin_pg + cil
            for ky in range(kh):
                for kx in range(kw):
                    taps[ky * kw + kx, ci, co] = w2[co, cil, ky, kx]
    return jnp.asarray(taps.reshape(kh * kw * c_pad, c_pad))


def resnext_block_forward(X_nchw, params):
    """Forward pass of ResNextBlock (use_1x1_conv=False, strides=1)."""
    # TODO(synk): projection shortcut (use_1x1_conv=True / strides>1, conv4/bn4)
    # not implemented; this covers the default identity-shortcut configuration.
    N, Cin, H, W = X_nchw.shape
    bot = params["bot"]
    Cout = params["w3"].shape[0]
    assert Cin == Cout, "identity shortcut requires in_channels == out_channels"
    M = N * H * W
    Cin_p = _pad_to_lane(Cin)
    Cb = _pad_to_lane(bot)
    Co_p = _pad_to_lane(Cout)

    def pad_vec(v, cp):
        return jnp.pad(v.astype(jnp.float32), (0, cp - v.shape[0]))

    x_nhwc = jnp.transpose(X_nchw, (0, 2, 3, 1)).astype(jnp.float32)
    x2d = x_nhwc.reshape(M, Cin)
    # bf16 padded input: matmul operand AND residual (halves residual traffic).
    x_bf = jnp.pad(x2d, ((0, 0), (0, Cin_p - Cin))).astype(jnp.bfloat16)

    # ---- stage 1: 1x1 conv (bias absorbed by BN1) + partial stats ----
    w1 = params["w1"].reshape(bot, Cin).T                       # (Cin, bot)
    w1_p = jnp.pad(w1, ((0, Cin_p - Cin), (0, Cb - bot))).astype(jnp.bfloat16)
    y1, p1a, p1b = matmul_stats(x_bf, w1_p)
    sc1, sh1 = _bn_scale_shift(p1a, p1b, M, pad_vec(params["g1"], Cb),
                               pad_vec(params["be1"], Cb))

    # ---- stage 2: BN1+ReLU fused into grouped 3x3 conv (in-VMEM halo) ----
    y2, p2a, p2b = grouped_conv3x3_stats(
        y1.reshape(N, H, W, Cb), sc1, sh1, params["w2_im2col"], H, W)
    sc2, sh2 = _bn_scale_shift(p2a, p2b, M, pad_vec(params["g2"], Cb),
                               pad_vec(params["be2"], Cb))

    # ---- stage 3: BN2+ReLU fused into the 1x1 conv + partial stats ----
    w3 = params["w3"].reshape(Cout, bot).T                      # (bot, Cout)
    w3_p = jnp.pad(w3, ((0, Cb - bot), (0, Co_p - Cout))).astype(jnp.bfloat16)
    y3, p3a, p3b = bn_relu_matmul_stats(y2.reshape(M, Cb), sc2, sh2, w3_p)
    sc3, sh3 = _bn_scale_shift(p3a, p3b, M, pad_vec(params["g3"], Co_p),
                               pad_vec(params["be3"], Co_p))

    # ---- epilogue: BN3 + identity shortcut + ReLU ----
    out = bn_residual_relu(y3, sc3, sh3, x_bf, out_dtype=jnp.float32)

    out = out.reshape(N, H, W, Co_p)[..., :Cout]
    return jnp.transpose(out, (0, 3, 1, 2))


# ------------------------- pure-JAX reference check ------------------------ #
def reference_forward(X, p):
    conv2_groups = p["conv2_groups"]

    def conv(x, w, b, pad=0, fg=1):
        y = jax.lax.conv_general_dilated(
            x, w, (1, 1), [(pad, pad), (pad, pad)],
            feature_group_count=fg,
            dimension_numbers=("NCHW", "OIHW", "NCHW"))
        return y + b[None, :, None, None]

    def bn(x, g, be):
        mean = jnp.mean(x, axis=(0, 2, 3), keepdims=True)
        var = jnp.mean((x - mean) ** 2, axis=(0, 2, 3), keepdims=True)
        return (x - mean) * jax.lax.rsqrt(var + _EPS) * g[None, :, None, None] \
            + be[None, :, None, None]

    Y = jax.nn.relu(bn(conv(X, p["w1"], p["b1"]), p["g1"], p["be1"]))
    Y = jax.nn.relu(bn(conv(Y, p["w2"], p["b2"], pad=1, fg=conv2_groups),
                       p["g2"], p["be2"]))
    Y = bn(conv(Y, p["w3"], p["b3"]), p["g3"], p["be3"])
    return jax.nn.relu(Y + X)


if __name__ == "__main__":
    key = jax.random.PRNGKey(0)
    kx, kp = jax.random.split(key)

    # small shapes consistent with the module's constraints
    # (identity shortcut -> in == out, divisible by groups)
    N, Cin, H, W = 2, 8, 16, 16
    Cout, groups = 8, 2

    X = jax.random.normal(kx, (N, Cin, H, W), jnp.float32)
    params = init_params(kp, Cin, Cout, groups)
    params["w2_im2col"] = grouped_conv_weight_to_im2col(
        params["w2"], params["conv2_groups"],
        _pad_to_lane(params["bot"])).astype(jnp.bfloat16)

    out = resnext_block_forward(X, params)
    out = jax.block_until_ready(out)

    ref = reference_forward(X, params)
    # bf16 matmul inputs / bf16 intermediates with f32 accumulation and f32 BN
    # -> compare against the full-f32 reference with a bf16-appropriate tolerance.
    np.testing.assert_allclose(np.asarray(out), np.asarray(ref),
                               rtol=3e-2, atol=3e-2)
    print("KERNEL_OK")
</pallas_src>

<mosaic_0001>
module attributes {stable_mosaic.version = 11 : i64} {
  func.func @_mm_stats_kernel(%arg0: i32, %arg1: memref<256x128xbf16, #tpu.memory_space<vmem>>, %arg2: memref<128x128xbf16, #tpu.memory_space<vmem>>, %arg3: memref<256x128xbf16, #tpu.memory_space<vmem>>, %arg4: memref<1x1x128xf32, #tpu.memory_space<vmem>>, %arg5: memref<1x1x128xf32, #tpu.memory_space<vmem>>) attributes {dimension_semantics = [#tpu.dimension_semantics<parallel>], iteration_bounds = array<i64: 2>, scalar_prefetch = 0 : i64, scratch_operands = 0 : i64, tpu.core_type = #tpu.core_type<tc>, window_params = [{transform_indices = @transform_0, window_bounds = array<i64: 256, 128>}, {pipeline_mode = #tpu.pipeline_mode<synchronous>, transform_indices = @transform_1, window_bounds = array<i64: 128, 128>}, {transform_indices = @transform_2, window_bounds = array<i64: 256, 128>}, {transform_indices = @transform_3, window_bounds = array<i64: 1, 1, 128>}, {transform_indices = @transform_4, window_bounds = array<i64: 1, 1, 128>}]} {
    %c0 = arith.constant 0 : index
    %c0_0 = arith.constant 0 : index
    %0 = vector.load %arg1[%c0, %c0_0] : memref<256x128xbf16, #tpu.memory_space<vmem>>, vector<256x128xbf16>
    %c0_1 = arith.constant 0 : index
    %c0_2 = arith.constant 0 : index
    %1 = vector.load %arg2[%c0_1, %c0_2] : memref<128x128xbf16, #tpu.memory_space<vmem>>, vector<128x128xbf16>
    %cst = arith.constant dense<0.000000e+00> : vector<256x128xf32>
    %2 = tpu.matmul %0, %1, %cst {dimension_numbers = #tpu.dot_dimension_numbers<[1], [0], [0], [1], [0, 0, 1, 1], [], []>} : vector<256x128xbf16>, vector<128x128xbf16>, vector<256x128xf32> -> vector<256x128xf32>
    %3 = arith.truncf %2 : vector<256x128xf32> to vector<256x128xbf16>
    %c0_3 = arith.constant 0 : index
    %c0_4 = arith.constant 0 : index
    %4 = vector.load %arg3[%c0_3, %c0_4] : memref<256x128xbf16, #tpu.memory_space<vmem>>, vector<256x128xbf16>
    tpu.vector_store %arg3[%c0_3, %c0_4], %3 {strides = array<i32>} : memref<256x128xbf16, #tpu.memory_space<vmem>>, vector<256x128xbf16>,
    %cst_5 = arith.constant dense<0.000000e+00> : vector<128xf32>
    %5 = vector.multi_reduction <add>, %2, %cst_5 [0] : vector<256x128xf32> to vector<128xf32>
    %6 = vector.shape_cast %5 : vector<128xf32> to vector<1x128xf32>
    %c0_6 = arith.constant 0 : index
    %c0_7 = arith.constant 0 : index
    %c0_8 = arith.constant 0 : index
    %7 = vector.load %arg4[%c0_6, %c0_7, %c0_8] : memref<1x1x128xf32, #tpu.memory_space<vmem>>, vector<1x1x128xf32>
    %8 = vector.shape_cast %7 : vector<1x1x128xf32> to vector<1x128xf32>
    %9 = vector.shape_cast %6 : vector<1x128xf32> to vector<1x1x128xf32>
    tpu.vector_store %arg4[%c0_6, %c0_7, %c0_8], %9 {strides = array<i32>} : memref<1x1x128xf32, #tpu.memory_space<vmem>>, vector<1x1x128xf32>,
    %10 = arith.mulf %2, %2 : vector<256x128xf32>
    %cst_9 = arith.constant dense<0.000000e+00> : vector<128xf32>
    %11 = vector.multi_reduction <add>, %10, %cst_9 [0] : vector<256x128xf32> to vector<128xf32>
    %12 = vector.shape_cast %11 : vector<128xf32> to vector<1x128xf32>
    %c0_10 = arith.constant 0 : index
    %c0_11 = arith.constant 0 : index
    %c0_12 = arith.constant 0 : index
    %13 = vector.load %arg5[%c0_10, %c0_11, %c0_12] : memref<1x1x128xf32, #tpu.memory_space<vmem>>, vector<1x1x128xf32>
    %14 = vector.shape_cast %13 : vector<1x1x128xf32> to vector<1x128xf32>
    %15 = vector.shape_cast %12 : vector<1x128xf32> to vector<1x1x128xf32>
    tpu.vector_store %arg5[%c0_10, %c0_11, %c0_12], %15 {strides = array<i32>} : memref<1x1x128xf32, #tpu.memory_space<vmem>>, vector<1x1x128xf32>,
    return
  }
  func.func @transform_0(%arg0: i32) -> (i32, i32) {
    %c0_i32 = arith.constant 0 : i32
    %c0_i32_0 = arith.constant 0 : i32
    return %arg0, %c0_i32 : i32, i32
  }
  func.func @transform_1(%arg0: i32) -> (i32, i32) {
    %c0_i32 = arith.constant 0 : i32
    %c0_i32_0 = arith.constant 0 : i32
    %c0_i32_1 = arith.constant 0 : i32
    return %c0_i32, %c0_i32_0 : i32, i32
  }
  func.func @transform_2(%arg0: i32) -> (i32, i32) {
    %c0_i32 = arith.constant 0 : i32
    %c0_i32_0 = arith.constant 0 : i32
    return %arg0, %c0_i32 : i32, i32
  }
  func.func @transform_3(%arg0: i32) -> (i32, i32, i32) {
    %c0_i32 = arith.constant 0 : i32
    %c0_i32_0 = arith.constant 0 : i32
    %c0_i32_1 = arith.constant 0 : i32
    return %arg0, %c0_i32, %c0_i32_0 : i32, i32, i32
  }
  func.func @transform_4(%arg0: i32) -> (i32, i32, i32) {
    %c0_i32 = arith.constant 0 : i32
    %c0_i32_0 = arith.constant 0 : i32
    %c0_i32_1 = arith.constant 0 : i32
    return %arg0, %c0_i32, %c0_i32_0 : i32, i32, i32
  }
}

</mosaic_0001>

<llo_original>
// kernel: tpu_custom_call.1
$region0: #{tpu_custom_call.1}
  #allocation0 [shape = 'u32[]', space=smem, size = 0x4, offset = 0x4, fixed_abs, tag = 'smem constant byte address 0x4 - core index']
  #allocation1 [shape = 'u32[144,128]{1,0:T(1,128)}', space=vmem, size = 0x12000, scoped, tag = 'internal scratch']
  %s0 = inlined_call_operand.hbm [shape: bf16[512,128], index: 0, kind: input, shape index: {}]
  %s1 = inlined_call_operand.hbm [shape: bf16[128,128], index: 1, kind: input, shape index: {}]
  %s2 = inlined_call_operand.hbm [shape: bf16[512,128], index: 2, kind: output, shape index: {0}]
  %s3 = inlined_call_operand.hbm [shape: f32[2,1,128], index: 3, kind: output, shape index: {1}]
  %s4 = inlined_call_operand.hbm [shape: f32[2,1,128], index: 4, kind: output, shape index: {2}]
  %5 = xla_tuple %s2, %s3, %s4
  %s6 = sld [smem:[#allocation0]]
  $region65: #{tpu_custom_call.1} parent=0
    _
  %s8 = ssub.s32 1, %s6
  %s9 = scalar_select 0, %s8, %s6
  $region1: #{tpu_custom_call.1} parent=0
    #allocation2 [shape = 'u8[131072]{0}', space=vmem, size = 0x20000, scoped, tag = 'input window, operand 0']
    #allocation3 [shape = 's32[2]{0}', space=sflag, size = 0x8, scoped, tag = 'scoped memory for tpu_custom_call.1']
    #allocation4 [shape = 's32[2]{0}', space=sflag, size = 0x8, scoped, tag = 'scoped memory for tpu_custom_call.1']
    #allocation5 [shape = 'u8[32768]{0}', space=vmem, size = 0x8000, scoped, tag = 'input window, operand 1, single buffered']
    #allocation6 [shape = 's32[1]{0}', space=sflag, size = 0x4, scoped, tag = 'scoped memory for tpu_custom_call.1']
    #allocation7 [shape = 'u8[131072]{0}', space=vmem, size = 0x20000, scoped, tag = 'output window, operand 0']
    #allocation8 [shape = 'u8[1024]{0}', space=vmem, size = 0x400, scoped, tag = 'output window, operand 1']
    #allocation9 [shape = 's32[2]{0}', space=sflag, size = 0x8, scoped, tag = 'scoped memory for tpu_custom_call.1']
    #allocation10 [shape = 'u8[1024]{0}', space=vmem, size = 0x400, scoped, tag = 'output window, operand 2']
    %10 = vsyncpa [#allocation3], 0
    %s11 = scalar_lea.sflag [#allocation3], 1
    %12 = vsyncpa %s11, 0
    %13 = vsyncpa [#allocation6], 0
    %14 = vsyncpa [#allocation4], 0
    %s15 = scalar_lea.sflag [#allocation4], 1
    %16 = vsyncpa %s15, 0
    %17 = vsyncpa [#allocation9], 0
    %s18 = scalar_lea.sflag [#allocation9], 1
    %19 = vsyncpa %s18, 0
    loop: start=0, step=1, limit=4
    $region2: #{tpu_custom_call.1} parent=1 // loop_pre_header
      _
    $region3: #{tpu_custom_call.1} parent=1 // loop_header
      %s21 = sphi 0, %s25
      %p22 = scmp.ge.s32.totalorder %s21, 4
      %s31 = sphi 0, %s33
      %s34 = sphi 0, %s31
      %s35 = sphi 0, %s34
      %s51 = sphi 0, %s35
      %s55 = sphi 0, %s55
      %s57 = sphi 0, %s55
      %s58 = sphi 0, %s57
      %s72 = sphi 0, %s58
      %s78 = sphi 0, %s80
      %s81 = sphi 0, %s78
      %s82 = sphi 0, %s81
      %s98 = sphi 0, %s82
      %s104 = sphi 0, %s106
      %s107 = sphi 0, %s104
      %s108 = sphi 0, %s107
      %s124 = sphi 0, %s108
      %s130 = sphi 0, %s132
      %s133 = sphi 0, %s130
      %s134 = sphi 0, %s133
      %s150 = sphi 0, %s134
    $region4: #{tpu_custom_call.1} parent=1 // loop_header_branch
      %24 = sbr.rel (%p22) target = $region8
    $region5: #{tpu_custom_call.1} parent=1 // loop_body
      %s26 = ssub.s32 %s21, 1
      %s27 = ssub.s32 %s21, 2
      %s28 = sadd.s32 %s21, 1
      %s29 = ssub.s32 %s21, %s28
      %p30 = scmp.eq.s32.totalorder %s29, 0
      %s32 = sadd.s32 %s31, 1
      %s33 = scalar_select %p30, %s31, %s32
      %p36 = pneg %p30
      %p37 = scmp.eq.s32.totalorder %s21, 1
      %p38 = por %p36, %p37
      %p39 = scmp.ne.s32.totalorder %s31, %s34
      %p40 = scmp.eq.s32.totalorder %s21, 0
      %p41 = por %p39, %p40
      %p42 = scmp.ne.s32.totalorder %s31, %s34
      %p43 = scmp.eq.s32.totalorder %s26, 1
      %p44 = por %p42, %p43
      %p45 = scmp.ne.s32.totalorder %s34, %s35
      %p46 = scmp.eq.s32.totalorder %s26, 0
      %p47 = por %p45, %p46
      %p48 = scmp.ne.s32.totalorder %s34, %s35
      %p49 = scmp.eq.s32.totalorder %s27, 1
      %p50 = por %p48, %p49
      %p52 = scmp.ne.s32.totalorder %s35, %s51
      %p53 = scmp.eq.s32.totalorder %s27, 0
      %p54 = por %p52, %p53
      %s56 = sadd.s32 %s55, 1
      %p59 = scmp.eq.s32.totalorder %s21, 1
      %p60 = scmp.ne.s32.totalorder %s55, %s57
      %p61 = scmp.eq.s32.totalorder %s21, 0
      %p62 = por %p60, %p61
      %p63 = scmp.ne.s32.totalorder %s55, %s57
      %p64 = scmp.eq.s32.totalorder %s26, 1
      %p65 = por %p63, %p64
      %p66 = scmp.ne.s32.totalorder %s57, %s58
      %p67 = scmp.eq.s32.totalorder %s26, 0
      %p68 = por %p66, %p67
      %p69 = scmp.ne.s32.totalorder %s57, %s58
      %p70 = scmp.eq.s32.totalorder %s27, 1
      %p71 = por %p69, %p70
      %p73 = scmp.ne.s32.totalorder %s58, %s72
      %p74 = scmp.eq.s32.totalorder %s27, 0
      %p75 = por %p73, %p74
      %s76 = ssub.s32 %s21, %s28
      %p77 = scmp.eq.s32.totalorder %s76, 0
      %s79 = sadd.s32 %s78, 1
      %s80 = scalar_select %p77, %s78, %s79
      %p83 = pneg %p77
      %p84 = scmp.eq.s32.totalorder %s21, 1
      %p85 = por %p83, %p84
      %p86 = scmp.ne.s32.totalorder %s78, %s81
      %p87 = scmp.eq.s32.totalorder %s21, 0
      %p88 = por %p86, %p87
      %p89 = scmp.ne.s32.totalorder %s78, %s81
      %p90 = scmp.eq.s32.totalorder %s26, 1
      %p91 = por %p89, %p90
      %p92 = scmp.ne.s32.totalorder %s81, %s82
      %p93 = scmp.eq.s32.totalorder %s26, 0
      %p94 = por %p92, %p93
      %p95 = scmp.ne.s32.totalorder %s81, %s82
      %p96 = scmp.eq.s32.totalorder %s27, 1
      %p97 = por %p95, %p96
      %p99 = scmp.ne.s32.totalorder %s82, %s98
      %p100 = scmp.eq.s32.totalorder %s27, 0
      %p101 = por %p99, %p100
      %s102 = ssub.s32 %s21, %s28
      %p103 = scmp.eq.s32.totalorder %s102, 0
      %s105 = sadd.s32 %s104, 1
      %s106 = scalar_select %p103, %s104, %s105
      %p109 = pneg %p103
      %p110 = scmp.eq.s32.totalorder %s21, 1
      %p111 = por %p109, %p110
      %p112 = scmp.ne.s32.totalorder %s104, %s107
      %p113 = scmp.eq.s32.totalorder %s21, 0
      %p114 = por %p112, %p113
      %p115 = scmp.ne.s32.totalorder %s104, %s107
      %p116 = scmp.eq.s32.totalorder %s26, 1
      %p117 = por %p115, %p116
      %p118 = scmp.ne.s32.totalorder %s107, %s108
      %p119 = scmp.eq.s32.totalorder %s26, 0
      %p120 = por %p118, %p119
      %p121 = scmp.ne.s32.totalorder %s107, %s108
      %p122 = scmp.eq.s32.totalorder %s27, 1
      %p123 = por %p121, %p122
      %p125 = scmp.ne.s32.totalorder %s108, %s124
      %p126 = scmp.eq.s32.totalorder %s27, 0
      %p127 = por %p125, %p126
      %s128 = ssub.s32 %s21, %s28
      %p129 = scmp.eq.s32.totalorder %s128, 0
      %s131 = sadd.s32 %s130, 1
      %s132 = scalar_select %p129, %s130, %s131
      %p135 = pneg %p129
      %p136 = scmp.eq.s32.totalorder %s21, 1
      %p137 = por %p135, %p136
      %p138 = scmp.ne.s32.totalorder %s130, %s133
      %p139 = scmp.eq.s32.totalorder %s21, 0
      %p140 = por %p138, %p139
      %p141 = scmp.ne.s32.totalorder %s130, %s133
      %p142 = scmp.eq.s32.totalorder %s26, 1
      %p143 = por %p141, %p142
      %p144 = scmp.ne.s32.totalorder %s133, %s134
      %p145 = scmp.eq.s32.totalorder %s26, 0
      %p146 = por %p144, %p145
      %p147 = scmp.ne.s32.totalorder %s133, %s134
      %p148 = scmp.eq.s32.totalorder %s27, 1
      %p149 = por %p147, %p148
      %p151 = scmp.ne.s32.totalorder %s134, %s150
      %p152 = scmp.eq.s32.totalorder %s27, 0
      %p153 = por %p151, %p152
      %p154 = scmp.le.s32.totalorder 1, %s21
      %p155 = scmp.lt.s32.totalorder %s21, 3
      %p156 = pnand %p154, %p155
      %p157 = pneg %p156
      // Predicated region
      $region9: #{tpu_custom_call.1} parent=5 // pred_check
        _
      $region10: #{tpu_custom_call.1} parent=5 // pred_check_branch
        %159 = sbr.rel (%p156) target = $region12
      $region11: #{tpu_custom_call.1} parent=5 // pred_region
        %s160 = ssub.s32 %s21, 1
        // Predicated region
        $region13: #{tpu_custom_call.1} parent=11 // pred_check
          %p161 = pneg %p68
        $region14: #{tpu_custom_call.1} parent=11 // pred_check_branch
          %163 = sbr.rel (%p161) target = $region16
        $region15: #{tpu_custom_call.1} parent=11 // pred_region
          %s165 = ssub.s32 1024, 1024
          %166 = vsyncadd [#allocation6], %s165
          %s167 = sshll.u32 [#allocation5], 4
          %s168 = int_to_ptr.vmem [resolvable:$true] %s167
          %173 = dma.hbm_to_vmem [thread:$0]  %s1, 1024, %s168, [#allocation6], 64, 64, 4
        $region16: #{tpu_custom_call.1} parent=11 // pred_fallthru
          _
      $region12: #{tpu_custom_call.1} parent=5 // pred_fallthru
        _
      %p174 = scmp.lt.s32.totalorder %s21, 2
      // Predicated region
      $region17: #{tpu_custom_call.1} parent=5 // pred_check
        %p175 = pneg %p174
      $region18: #{tpu_custom_call.1} parent=5 // pred_check_branch
        %177 = sbr.rel (%p175) target = $region20
      $region19: #{tpu_custom_call.1} parent=5 // pred_region
        // Predicated region
        $region21: #{tpu_custom_call.1} parent=19 // pred_check
          %p178 = pneg %p41
        $region22: #{tpu_custom_call.1} parent=19 // pred_check_branch
          %180 = sbr.rel (%p178) target = $region24
        $region23: #{tpu_custom_call.1} parent=19 // pred_region
          %s181 = sand.u32 %s31, 1
          %s182 = scalar_lea.sflag [#allocation3], %s181
          %s183 = sand.u32 %s31, 1
          %s184 = smul.addr %s183, 128
          %s185 = scalar_lea.vmem [#allocation2], %s184
          %s186 = smul.u32 32, %s21
          %s188 = ssub.s32 2048, 2048
          %189 = vsyncadd %s182, %s188
          %s190 = smul.addr %s186, 64
          %s191 = scalar_lea.hbm %s0, %s190
          %s192 = sshll.u32 %s185, 4
          %s193 = int_to_ptr.vmem [resolvable:$true] %s192
          %198 = dma.hbm_to_vmem [thread:$0]  %s191, 2048, %s193, %s182, 64, 64, 4
        $region24: #{tpu_custom_call.1} parent=19 // pred_fallthru
          _
      $region20: #{tpu_custom_call.1} parent=5 // pred_fallthru
        _
      %p199 = scmp.le.s32.totalorder 1, %s21
      %p200 = scmp.lt.s32.totalorder %s21, 3
      %p201 = pnand %p199, %p200
      %p202 = pneg %p201
      // Predicated region
      $region25: #{tpu_custom_call.1} parent=5 // pred_check
        _
      $region26: #{tpu_custom_call.1} parent=5 // pred_check_branch
        %204 = sbr.rel (%p201) target = $region28
      $region27: #{tpu_custom_call.1} parent=5 // pred_region
        %s205 = ssub.s32 %s21, 1
        %s206 = sand.u32 %s34, 1
        %s207 = scalar_lea.sflag [#allocation3], %s206
        %s208 = sand.u32 %s34, 1
        %s209 = smul.addr %s208, 128
        %s210 = scalar_lea.vmem [#allocation2], %s209
        // Predicated region
        $region29: #{tpu_custom_call.1} parent=27 // pred_check
          %p211 = pneg %p47
        $region30: #{tpu_custom_call.1} parent=27 // pred_check_branch
          %213 = sbr.rel (%p211) target = $region32
        $region31: #{tpu_custom_call.1} parent=27 // pred_region
          %214 = dma.done %s207, 2048
        $region32: #{tpu_custom_call.1} parent=27 // pred_fallthru
          _
        // Predicated region
        $region33: #{tpu_custom_call.1} parent=27 // pred_check
          %p215 = pneg %p68
        $region34: #{tpu_custom_call.1} parent=27 // pred_check_branch
          %217 = sbr.rel (%p215) target = $region36
        $region35: #{tpu_custom_call.1} parent=27 // pred_region
          %218 = dma.done [#allocation6], 1024
        $region36: #{tpu_custom_call.1} parent=27 // pred_fallthru
          _
        %s219 = sand.u32 %s34, 1
        %s220 = scalar_lea.sflag [#allocation3], %s219
        %s221 = sand.u32 %s34, 1
        %s222 = smul.addr %s221, 128
        %s223 = scalar_lea.vmem [#allocation2], %s222
        %p224 = pneg %p47
        %p225 = pneg %p44
        %p226 = pneg %p68
        %p227 = pneg %p65
        %p228 = pneg %p94
        %p229 = pneg %p91
        %s230 = sand.u32 %s81, 1
        %s231 = scalar_lea.sflag [#allocation4], %s230
        %s232 = sand.u32 %s81, 1
        %s233 = smul.addr %s232, 128
        %s234 = scalar_lea.vmem [#allocation7], %s233
        %p235 = pneg %p120
        %p236 = pneg %p117
        %s237 = sand.u32 %s26, 1
        %s238 = scalar_lea.sflag [#allocation9], %s237
        %s239 = sand.u32 %s107, 1
        %s240 = scalar_lea.vmem [#allocation8], %s239
        %p241 = pneg %p146
        %p242 = pneg %p143
        %s243 = sand.u32 %s26, 1
        %s244 = scalar_lea.sflag [#allocation9], %s243
        %s245 = sand.u32 %s133, 1
        %s246 = scalar_lea.vmem [#allocation10], %s245
        %s247 = smul.u32 32, %s26
        %s248 = smul.u32 32, %s26
        %v250 = vld [vmem:[%s210] sm:$0xf]
        %v251 = vld [vmem:[%s210 + $0x4] sm:$0xf]
        %v252 = vld [vmem:[%s210 + $0x8] sm:$0xf]
        %v253 = vld [vmem:[%s210 + $0xc] sm:$0xf]
        %v254 = vld [vmem:[%s210 + $0x10] sm:$0xf]
        %v255 = vld [vmem:[%s210 + $0x14] sm:$0xf]
        %v256 = vld [vmem:[%s210 + $0x18] sm:$0xf]
        %v257 = vld [vmem:[%s210 + $0x1c] sm:$0xf]
        %v258 = vld [vmem:[%s210 + $0x20] sm:$0xf]
        %v259 = vld [vmem:[%s210 + $0x24] sm:$0xf]
        %v260 = vld [vmem:[%s210 + $0x28] sm:$0xf]
        %v261 = vld [vmem:[%s210 + $0x2c] sm:$0xf]
        %v262 = vld [vmem:[%s210 + $0x30] sm:$0xf]
        %v263 = vld [vmem:[%s210 + $0x34] sm:$0xf]
        %v264 = vld [vmem:[%s210 + $0x38] sm:$0xf]
        %v265 = vld [vmem:[%s210 + $0x3c] sm:$0xf]
        %v266 = vld [vmem:[%s210 + $0x40] sm:$0xf]
        %v267 = vld [vmem:[%s210 + $0x44] sm:$0xf]
        %v268 = vld [vmem:[%s210 + $0x48] sm:$0xf]
        %v269 = vld [vmem:[%s210 + $0x4c] sm:$0xf]
        %v270 = vld [vmem:[%s210 + $0x50] sm:$0xf]
        %v271 = vld [vmem:[%s210 + $0x54] sm:$0xf]
        %v272 = vld [vmem:[%s210 + $0x58] sm:$0xf]
        %v273 = vld [vmem:[%s210 + $0x5c] sm:$0xf]
        %v274 = vld [vmem:[%s210 + $0x60] sm:$0xf]
        %v275 = vld [vmem:[%s210 + $0x64] sm:$0xf]
        %v276 = vld [vmem:[%s210 + $0x68] sm:$0xf]
        %v277 = vld [vmem:[%s210 + $0x6c] sm:$0xf]
        %v278 = vld [vmem:[%s210 + $0x70] sm:$0xf]
        %v279 = vld [vmem:[%s210 + $0x74] sm:$0xf]
        %v280 = vld [vmem:[%s210 + $0x78] sm:$0xf]
        %v281 = vld [vmem:[%s210 + $0x7c] sm:$0xf]
        %v282 = vld [vmem:[#allocation5] sm:$0xf]
        %v283 = vld [vmem:[#allocation5 + $0x4] sm:$0xf]
        %v284 = vld [vmem:[#allocation5 + $0x8] sm:$0xf]
        %v285 = vld [vmem:[#allocation5 + $0xc] sm:$0xf]
        %v286 = vld [vmem:[#allocation5 + $0x10] sm:$0xf]
        %v287 = vld [vmem:[#allocation5 + $0x14] sm:$0xf]
        %v288 = vld [vmem:[#allocation5 + $0x18] sm:$0xf]
        %v289 = vld [vmem:[#allocation5 + $0x1c] sm:$0xf]
        %v290 = vld [vmem:[#allocation5 + $0x20] sm:$0xf]
        %v291 = vld [vmem:[#allocation5 + $0x24] sm:$0xf]
        %v292 = vld [vmem:[#allocation5 + $0x28] sm:$0xf]
        %v293 = vld [vmem:[#allocation5 + $0x2c] sm:$0xf]
        %v294 = vld [vmem:[#allocation5 + $0x30] sm:$0xf]
        %v295 = vld [vmem:[#allocation5 + $0x34] sm:$0xf]
        %v296 = vld [vmem:[#allocation5 + $0x38] sm:$0xf]
        %v297 = vld [vmem:[#allocation5 + $0x3c] sm:$0xf]
        %v330 = vunpack.c.l.b16 %v250
        %v331 = vunpack.c.l.b16 %v251
        %v332 = vunpack.c.l.b16 %v252
        %v333 = vunpack.c.l.b16 %v253
        %v334 = vunpack.c.l.b16 %v254
        %v335 = vunpack.c.l.b16 %v255
        %v336 = vunpack.c.l.b16 %v256
        %v337 = vunpack.c.l.b16 %v257
        %v338 = vunpack.c.l.b16 %v258
        %v339 = vunpack.c.l.b16 %v259
        %v340 = vunpack.c.l.b16 %v260
        %v341 = vunpack.c.l.b16 %v261
        %v342 = vunpack.c.l.b16 %v262
        %v343 = vunpack.c.l.b16 %v263
        %v344 = vunpack.c.l.b16 %v264
        %v345 = vunpack.c.l.b16 %v265
        %v346 = vunpack.c.l.b16 %v266
        %v347 = vunpack.c.l.b16 %v267
        %v348 = vunpack.c.l.b16 %v268
        %v349 = vunpack.c.l.b16 %v269
        %v350 = vunpack.c.l.b16 %v270
        %v351 = vunpack.c.l.b16 %v271
        %v352 = vunpack.c.l.b16 %v272
        %v353 = vunpack.c.l.b16 %v273
        %v354 = vunpack.c.l.b16 %v274
        %v355 = vunpack.c.l.b16 %v275
        %v356 = vunpack.c.l.b16 %v276
        %v357 = vunpack.c.l.b16 %v277
        %v358 = vunpack.c.l.b16 %v278
        %v359 = vunpack.c.l.b16 %v279
        %v360 = vunpack.c.l.b16 %v280
        %v361 = vunpack.c.l.b16 %v281
        %v362 = vpack.c.b16 %v331, %v330
        %v363 = vpack.c.b16 %v333, %v332
        %v364 = vpack.c.b16 %v335, %v334
        %v365 = vpack.c.b16 %v337, %v336
        %v366 = vpack.c.b16 %v339, %v338
        %v367 = vpack.c.b16 %v341, %v340
        %v368 = vpack.c.b16 %v343, %v342
        %v369 = vpack.c.b16 %v345, %v344
        %v370 = vpack.c.b16 %v347, %v346
        %v371 = vpack.c.b16 %v349, %v348
        %v372 = vpack.c.b16 %v351, %v350
        %v373 = vpack.c.b16 %v353, %v352
        %v374 = vpack.c.b16 %v355, %v354
        %v375 = vpack.c.b16 %v357, %v356
        %v376 = vpack.c.b16 %v359, %v358
        %v377 = vpack.c.b16 %v361, %v360
        %v410 = vunpack.c.l.b16 %v282
        %v411 = vunpack.c.l.b16 %v283
        %v412 = vunpack.c.l.b16 %v284
        %v413 = vunpack.c.l.b16 %v285
        %v414 = vunpack.c.l.b16 %v286
        %v415 = vunpack.c.l.b16 %v287
        %v416 = vunpack.c.l.b16 %v288
        %v417 = vunpack.c.l.b16 %v289
        %v418 = vunpack.c.l.b16 %v290
        %v419 = vunpack.c.l.b16 %v291
        %v420 = vunpack.c.l.b16 %v292
        %v421 = vunpack.c.l.b16 %v293
        %v422 = vunpack.c.l.b16 %v294
        %v423 = vunpack.c.l.b16 %v295
        %v424 = vunpack.c.l.b16 %v296
        %v425 = vunpack.c.l.b16 %v297
        %v426 = vpack.c.b16 %v411, %v410
        %v427 = vpack.c.b16 %v413, %v412
        %v428 = vpack.c.b16 %v415, %v414
        %v429 = vpack.c.b16 %v417, %v416
        %v430 = vpack.c.b16 %v419, %v418
        %v431 = vpack.c.b16 %v421, %v420
        %v432 = vpack.c.b16 %v423, %v422
        %v433 = vpack.c.b16 %v425, %v424
        %442 = vmatprep.subr.bf16.mxu0 0
        %443 = vmatpush1.bf16.msra.mxu0 %v433
        %444 = vmatprep.subr.bf16.mxu0 0
        %445 = vmatpush1.bf16.msra.mxu0 %v432
        %446 = vmatprep.subr.bf16.mxu0 0
        %447 = vmatpush1.bf16.msra.mxu0 %v431
        %448 = vmatprep.subr.bf16.mxu0 0
        %449 = vmatpush1.bf16.msra.mxu0 %v430
        %450 = vmatprep.subr.bf16.mxu0 0
        %451 = vmatpush1.bf16.msra.mxu0 %v429
        %452 = vmatprep.subr.bf16.mxu0 0
        %453 = vmatpush1.bf16.msra.mxu0 %v428
        %454 = vmatprep.subr.bf16.mxu0 0
        %455 = vmatpush1.bf16.msra.mxu0 %v427
        %456 = vmatprep.subr.bf16.mxu0 0
        %457 = vmatpush1.bf16.msra.mxu0 %v426
        %458 = vmatprep.subr.bf16.mxu0 0
        %459 = vmatpush2.bf16.msra.mxu0 0
        %460 = vmatprep.subr.bf16.mxu0 0
        %461 = vmatpush2.bf16.msra.mxu0 0
        %462 = vmatprep.subr.bf16.mxu0 0
        %463 = vmatpush2.bf16.msra.mxu0 0
        %464 = vmatprep.subr.bf16.mxu0 0
        %465 = vmatpush2.bf16.msra.mxu0 0
        %466 = vmatprep.subr.bf16.mxu0 0
        %467 = vmatpush2.bf16.msra.mxu0 0
        %468 = vmatprep.subr.bf16.mxu0 0
        %469 = vmatpush2.bf16.msra.mxu0 0
        %470 = vmatprep.subr.bf16.mxu0 0
        %471 = vmatpush2.bf16.msra.mxu0 0
        %472 = vmatprep.subr.bf16.mxu0 0
        %473 = vmatpush2.bf16.msra.mxu0 0
        %474 = vmatprep.mubr.bf16.mxu0 0
        %475 = vmatmul.mubr.bf16.gmra.mxu0 %v362
        %v476 = vpop.f32.mrf.mxu0
        %v477 = vadd.f32 0.0, %v476
        %v478 = vpop.f32.mrf.mxu0
        %v479 = vpop.f32.mrf.mxu0
        %v480 = vadd.f32 0.0, %v479
        %v481 = vpop.f32.mrf.mxu0
        %482 = vmatprep.mubr.bf16.mxu0 0
        %483 = vmatmul.mubr.bf16.gmra.mxu0 %v363
        %v484 = vpop.f32.mrf.mxu0
        %v485 = vadd.f32 0.0, %v484
        %v486 = vpop.f32.mrf.mxu0
        %v487 = vpop.f32.mrf.mxu0
        %v488 = vadd.f32 0.0, %v487
        %v489 = vpop.f32.mrf.mxu0
        %490 = vmatprep.mubr.bf16.mxu0 0
        %491 = vmatmul.mubr.bf16.gmra.mxu0 %v364
        %v492 = vpop.f32.mrf.mxu0
        %v493 = vadd.f32 0.0, %v492
        %v494 = vpop.f32.mrf.mxu0
        %v495 = vpop.f32.mrf.mxu0
        %v496 = vadd.f32 0.0, %v495
        %v497 = vpop.f32.mrf.mxu0
        %498 = vmatprep.mubr.bf16.mxu0 0
        %499 = vmatmul.mubr.bf16.gmra.mxu0 %v365
        %v500 = vpop.f32.mrf.mxu0
        %v501 = vadd.f32 0.0, %v500
        %v502 = vpop.f32.mrf.mxu0
        %v503 = vpop.f32.mrf.mxu0
        %v504 = vadd.f32 0.0, %v503
        %v505 = vpop.f32.mrf.mxu0
        %506 = vmatprep.mubr.bf16.mxu0 0
        %507 = vmatmul.mubr.bf16.gmra.mxu0 %v366
        %v508 = vpop.f32.mrf.mxu0
        %v509 = vadd.f32 0.0, %v508
        %v510 = vpop.f32.mrf.mxu0
        %v511 = vpop.f32.mrf.mxu0
        %v512 = vadd.f32 0.0, %v511
        %v513 = vpop.f32.mrf.mxu0
        %514 = vmatprep.mubr.bf16.mxu0 0
        %515 = vmatmul.mubr.bf16.gmra.mxu0 %v367
        %v516 = vpop.f32.mrf.mxu0
        %v517 = vadd.f32 0.0, %v516
        %v518 = vpop.f32.mrf.mxu0
        %v519 = vpop.f32.mrf.mxu0
        %v520 = vadd.f32 0.0, %v519
        %v521 = vpop.f32.mrf.mxu0
        %522 = vmatprep.mubr.bf16.mxu0 0
        %523 = vmatmul.mubr.bf16.gmra.mxu0 %v368
        %v524 = vpop.f32.mrf.mxu0
        %v525 = vadd.f32 0.0, %v524
        %v526 = vpop.f32.mrf.mxu0
        %v527 = vpop.f32.mrf.mxu0
        %v528 = vadd.f32 0.0, %v527
        %v529 = vpop.f32.mrf.mxu0
        %530 = vmatprep.mubr.bf16.mxu0 0
        %531 = vmatmul.mubr.bf16.gmra.mxu0 %v369
        %v532 = vpop.f32.mrf.mxu0
        %v533 = vadd.f32 0.0, %v532
        %v534 = vpop.f32.mrf.mxu0
        %v535 = vpop.f32.mrf.mxu0
        %v536 = vadd.f32 0.0, %v535
        %v537 = vpop.f32.mrf.mxu0
        %538 = vmatprep.mubr.bf16.mxu0 0
        %539 = vmatmul.mubr.bf16.gmra.mxu0 %v370
        %v540 = vpop.f32.mrf.mxu0
        %v541 = vadd.f32 0.0, %v540
        %v542 = vpop.f32.mrf.mxu0
        %v543 = vpop.f32.mrf.mxu0
        %v544 = vadd.f32 0.0, %v543
        %v545 = vpop.f32.mrf.mxu0
        %546 = vmatprep.mubr.bf16.mxu0 0
        %547 = vmatmul.mubr.bf16.gmra.mxu0 %v371
        %v548 = vpop.f32.mrf.mxu0
        %v549 = vadd.f32 0.0, %v548
        %v550 = vpop.f32.mrf.mxu0
        %v551 = vpop.f32.mrf.mxu0
        %v552 = vadd.f32 0.0, %v551
        %v553 = vpop.f32.mrf.mxu0
        %554 = vmatprep.mubr.bf16.mxu0 0
        %555 = vmatmul.mubr.bf16.gmra.mxu0 %v372
        %v556 = vpop.f32.mrf.mxu0
        %v557 = vadd.f32 0.0, %v556
        %v558 = vpop.f32.mrf.mxu0
        %v559 = vpop.f32.mrf.mxu0
        %v560 = vadd.f32 0.0, %v559
        %v561 = vpop.f32.mrf.mxu0
        %562 = vmatprep.mubr.bf16.mxu0 0
        %563 = vmatmul.mubr.bf16.gmra.mxu0 %v373
        %v564 = vpop.f32.mrf.mxu0
        %v565 = vadd.f32 0.0, %v564
        %v566 = vpop.f32.mrf.mxu0
        %v567 = vpop.f32.mrf.mxu0
        %v568 = vadd.f32 0.0, %v567
        %v569 = vpop.f32.mrf.mxu0
        %570 = vmatprep.mubr.bf16.mxu0 0
        %571 = vmatmul.mubr.bf16.gmra.mxu0 %v374
        %v572 = vpop.f32.mrf.mxu0
        %v573 = vadd.f32 0.0, %v572
        %v574 = vpop.f32.mrf.mxu0
        %v575 = vpop.f32.mrf.mxu0
        %v576 = vadd.f32 0.0, %v575
        %v577 = vpop.f32.mrf.mxu0
        %578 = vmatprep.mubr.bf16.mxu0 0
        %579 = vmatmul.mubr.bf16.gmra.mxu0 %v375
        %v580 = vpop.f32.mrf.mxu0
        %v581 = vadd.f32 0.0, %v580
        %v582 = vpop.f32.mrf.mxu0
        %v583 = vpop.f32.mrf.mxu0
        %v584 = vadd.f32 0.0, %v583
        %v585 = vpop.f32.mrf.mxu0
        %586 = vmatprep.mubr.bf16.mxu0 0
        %587 = vmatmul.mubr.bf16.gmra.mxu0 %v376
        %v588 = vpop.f32.mrf.mxu0
        %v589 = vadd.f32 0.0, %v588
        %v590 = vpop.f32.mrf.mxu0
        %v591 = vpop.f32.mrf.mxu0
        %v592 = vadd.f32 0.0, %v591
        %v593 = vpop.f32.mrf.mxu0
        %594 = vmatprep.mubr.bf16.mxu0 0
        %595 = vmatmul.mubr.bf16.gmra.mxu0 %v377
        %v596 = vpop.f32.mrf.mxu0
        %v597 = vadd.f32 0.0, %v596
        %v598 = vpop.f32.mrf.mxu0
        %v599 = vpop.f32.mrf.mxu0
        %v600 = vadd.f32 0.0, %v599
        %v601 = vpop.f32.mrf.mxu0
        %602 = vdwg.mxu0
        %v603 = vpack.c.bf16 %v480, %v477
        %v604 = vpack.c.bf16 %v488, %v485
        %v605 = vpack.c.bf16 %v496, %v493
        %v606 = vpack.c.bf16 %v504, %v501
        %v607 = vpack.c.bf16 %v512, %v509
        %v608 = vpack.c.bf16 %v520, %v517
        %v609 = vpack.c.bf16 %v528, %v525
        %v610 = vpack.c.bf16 %v536, %v533
        %v611 = vpack.c.bf16 %v544, %v541
        %v612 = vpack.c.bf16 %v552, %v549
        %v613 = vpack.c.bf16 %v560, %v557
        %v614 = vpack.c.bf16 %v568, %v565
        %v615 = vpack.c.bf16 %v576, %v573
        %v616 = vpack.c.bf16 %v584, %v581
        %v617 = vpack.c.bf16 %v592, %v589
        %v618 = vpack.c.bf16 %v600, %v597
        %v635 = vunpack.c.l.b16 %v603
        %v636 = vunpack.c.h.b16 %v603
        %v637 = vunpack.c.l.b16 %v604
        %v638 = vunpack.c.h.b16 %v604
        %v639 = vunpack.c.l.b16 %v605
        %v640 = vunpack.c.h.b16 %v605
        %v641 = vunpack.c.l.b16 %v606
        %v642 = vunpack.c.h.b16 %v606
        %v643 = vunpack.c.l.b16 %v607
        %v644 = vunpack.c.h.b16 %v607
        %v645 = vunpack.c.l.b16 %v608
        %v646 = vunpack.c.h.b16 %v608
        %v647 = vunpack.c.l.b16 %v609
        %v648 = vunpack.c.h.b16 %v609
        %v649 = vunpack.c.l.b16 %v610
        %v650 = vunpack.c.h.b16 %v610
        %v651 = vunpack.c.l.b16 %v611
        %v652 = vunpack.c.h.b16 %v611
        %v653 = vunpack.c.l.b16 %v612
        %v654 = vunpack.c.h.b16 %v612
        %v655 = vunpack.c.l.b16 %v613
        %v656 = vunpack.c.h.b16 %v613
        %v657 = vunpack.c.l.b16 %v614
        %v658 = vunpack.c.h.b16 %v614
        %v659 = vunpack.c.l.b16 %v615
        %v660 = vunpack.c.h.b16 %v615
        %v661 = vunpack.c.l.b16 %v616
        %v662 = vunpack.c.h.b16 %v616
        %v663 = vunpack.c.l.b16 %v617
        %v664 = vunpack.c.h.b16 %v617
        %v665 = vunpack.c.l.b16 %v618
        %v666 = vunpack.c.h.b16 %v618
        %v667 = vpack.c.b16 %v635, %v635
        %v668 = vpack.c.b16 %v636, %v636
        %v669 = vpack.c.b16 %v637, %v637
        %v670 = vpack.c.b16 %v638, %v638
        %v671 = vpack.c.b16 %v639, %v639
        %v672 = vpack.c.b16 %v640, %v640
        %v673 = vpack.c.b16 %v641, %v641
        %v674 = vpack.c.b16 %v642, %v642
        %v675 = vpack.c.b16 %v643, %v643
        %v676 = vpack.c.b16 %v644, %v644
        %v677 = vpack.c.b16 %v645, %v645
        %v678 = vpack.c.b16 %v646, %v646
        %v679 = vpack.c.b16 %v647, %v647
        %v680 = vpack.c.b16 %v648, %v648
        %v681 = vpack.c.b16 %v649, %v649
        %v682 = vpack.c.b16 %v650, %v650
        %v683 = vpack.c.b16 %v651, %v651
        %v684 = vpack.c.b16 %v652, %v652
        %v685 = vpack.c.b16 %v653, %v653
        %v686 = vpack.c.b16 %v654, %v654
        %v687 = vpack.c.b16 %v655, %v655
        %v688 = vpack.c.b16 %v656, %v656
        %v689 = vpack.c.b16 %v657, %v657
        %v690 = vpack.c.b16 %v658, %v658
        %v691 = vpack.c.b16 %v659, %v659
        %v692 = vpack.c.b16 %v660, %v660
        %v693 = vpack.c.b16 %v661, %v661
        %v694 = vpack.c.b16 %v662, %v662
        %v695 = vpack.c.b16 %v663, %v663
        %v696 = vpack.c.b16 %v664, %v664
        %v697 = vpack.c.b16 %v665, %v665
        %v698 = vpack.c.b16 %v666, %v666
        %731 = vst [vmem:[%s234] sm:$0xf] %v667
        %732 = vst [vmem:[%s234 + $0x4] sm:$0xf] %v668
        %733 = vst [vmem:[%s234 + $0x8] sm:$0xf] %v669
        %734 = vst [vmem:[%s234 + $0xc] sm:$0xf] %v670
        %735 = vst [vmem:[%s234 + $0x10] sm:$0xf] %v671
        %736 = vst [vmem:[%s234 + $0x14] sm:$0xf] %v672
        %737 = vst [vmem:[%s234 + $0x18] sm:$0xf] %v673
        %738 = vst [vmem:[%s234 + $0x1c] sm:$0xf] %v674
        %739 = vst [vmem:[%s234 + $0x20] sm:$0xf] %v675
        %740 = vst [vmem:[%s234 + $0x24] sm:$0xf] %v676
        %741 = vst [vmem:[%s234 + $0x28] sm:$0xf] %v677
        %742 = vst [vmem:[%s234 + $0x2c] sm:$0xf] %v678
        %743 = vst [vmem:[%s234 + $0x30] sm:$0xf] %v679
        %744 = vst [vmem:[%s234 + $0x34] sm:$0xf] %v680
        %745 = vst [vmem:[%s234 + $0x38] sm:$0xf] %v681
        %746 = vst [vmem:[%s234 + $0x3c] sm:$0xf] %v682
        %747 = vst [vmem:[%s234 + $0x40] sm:$0xf] %v683
        %748 = vst [vmem:[%s234 + $0x44] sm:$0xf] %v684
        %749 = vst [vmem:[%s234 + $0x48] sm:$0xf] %v685
        %750 = vst [vmem:[%s234 + $0x4c] sm:$0xf] %v686
        %751 = vst [vmem:[%s234 + $0x50] sm:$0xf] %v687
        %752 = vst [vmem:[%s234 + $0x54] sm:$0xf] %v688
        %753 = vst [vmem:[%s234 + $0x58] sm:$0xf] %v689
        %754 = vst [vmem:[%s234 + $0x5c] sm:$0xf] %v690
        %755 = vst [vmem:[%s234 + $0x60] sm:$0xf] %v691
        %756 = vst [vmem:[%s234 + $0x64] sm:$0xf] %v692
        %757 = vst [vmem:[%s234 + $0x68] sm:$0xf] %v693
        %758 = vst [vmem:[%s234 + $0x6c] sm:$0xf] %v694
        %759 = vst [vmem:[%s234 + $0x70] sm:$0xf] %v695
        %760 = vst [vmem:[%s234 + $0x74] sm:$0xf] %v696
        %761 = vst [vmem:[%s234 + $0x78] sm:$0xf] %v697
        %762 = vst [vmem:[%s234 + $0x7c] sm:$0xf] %v698
        %v763 = vadd.f32 %v477, %v480
        %v764 = vadd.f32 %v763, %v485
        %v765 = vadd.f32 %v764, %v488
        %v766 = vadd.f32 %v765, %v493
        %v767 = vadd.f32 %v766, %v496
        %v768 = vadd.f32 %v767, %v501
        %v769 = vadd.f32 %v768, %v504
        %v770 = vadd.f32 %v769, %v509
        %v771 = vadd.f32 %v770, %v512
        %v772 = vadd.f32 %v771, %v517
        %v773 = vadd.f32 %v772, %v520
        %v774 = vadd.f32 %v773, %v525
        %v775 = vadd.f32 %v774, %v528
        %v776 = vadd.f32 %v775, %v533
        %v777 = vadd.f32 %v776, %v536
        %v778 = vadd.f32 %v777, %v541
        %v779 = vadd.f32 %v778, %v544
        %v780 = vadd.f32 %v779, %v549
        %v781 = vadd.f32 %v780, %v552
        %v782 = vadd.f32 %v781, %v557
        %v783 = vadd.f32 %v782, %v560
        %v784 = vadd.f32 %v783, %v565
        %v785 = vadd.f32 %v784, %v568
        %v786 = vadd.f32 %v785, %v573
        %v787 = vadd.f32 %v786, %v576
        %v788 = vadd.f32 %v787, %v581
        %v789 = vadd.f32 %v788, %v584
        %v790 = vadd.f32 %v789, %v589
        %v791 = vadd.f32 %v790, %v592
        %v792 = vadd.f32 %v791, %v597
        %v793 = vadd.f32 %v792, %v600
        %v794 = vrot.slane %v793, 4
        %v795 = vadd.f32 %v793, %v794
        %v796 = vrot.slane %v795, 2
        %v797 = vadd.f32 %v795, %v796
        %v798 = vrot.slane %v797, 1
        %v799 = vadd.f32 %v797, %v798
        %800 = vst [vmem:[%s240] sm:$0x1] %v799
        %v801 = vmul.f32 %v477, %v477
        %v802 = vmul.f32 %v480, %v480
        %v803 = vmul.f32 %v485, %v485
        %v804 = vmul.f32 %v488, %v488
        %v805 = vmul.f32 %v493, %v493
        %v806 = vmul.f32 %v496, %v496
        %v807 = vmul.f32 %v501, %v501
        %v808 = vmul.f32 %v504, %v504
        %v809 = vmul.f32 %v509, %v509
        %v810 = vmul.f32 %v512, %v512
        %v811 = vmul.f32 %v517, %v517
        %v812 = vmul.f32 %v520, %v520
        %v813 = vmul.f32 %v525, %v525
        %v814 = vmul.f32 %v528, %v528
        %v815 = vmul.f32 %v533, %v533
        %v816 = vmul.f32 %v536, %v536
        %v817 = vmul.f32 %v541, %v541
        %v818 = vmul.f32 %v544, %v544
        %v819 = vmul.f32 %v549, %v549
        %v820 = vmul.f32 %v552, %v552
        %v821 = vmul.f32 %v557, %v557
        %v822 = vmul.f32 %v560, %v560
        %v823 = vmul.f32 %v565, %v565
        %v824 = vmul.f32 %v568, %v568
        %v825 = vmul.f32 %v573, %v573
        %v826 = vmul.f32 %v576, %v576
        %v827 = vmul.f32 %v581, %v581
        %v828 = vmul.f32 %v584, %v584
        %v829 = vmul.f32 %v589, %v589
        %v830 = vmul.f32 %v592, %v592
        %v831 = vmul.f32 %v597, %v597
        %v832 = vmul.f32 %v600, %v600
        %v833 = vadd.f32 %v801, %v802
        %v834 = vadd.f32 %v833, %v803
        %v835 = vadd.f32 %v834, %v804
        %v836 = vadd.f32 %v835, %v805
        %v837 = vadd.f32 %v836, %v806
        %v838 = vadd.f32 %v837, %v807
        %v839 = vadd.f32 %v838, %v808
        %v840 = vadd.f32 %v839, %v809
        %v841 = vadd.f32 %v840, %v810
        %v842 = vadd.f32 %v841, %v811
        %v843 = vadd.f32 %v842, %v812
        %v844 = vadd.f32 %v843, %v813
        %v845 = vadd.f32 %v844, %v814
        %v846 = vadd.f32 %v845, %v815
        %v847 = vadd.f32 %v846, %v816
        %v848 = vadd.f32 %v847, %v817
        %v849 = vadd.f32 %v848, %v818
        %v850 = vadd.f32 %v849, %v819
        %v851 = vadd.f32 %v850, %v820
        %v852 = vadd.f32 %v851, %v821
        %v853 = vadd.f32 %v852, %v822
        %v854 = vadd.f32 %v853, %v823
        %v855 = vadd.f32 %v854, %v824
        %v856 = vadd.f32 %v855, %v825
        %v857 = vadd.f32 %v856, %v826
        %v858 = vadd.f32 %v857, %v827
        %v859 = vadd.f32 %v858, %v828
        %v860 = vadd.f32 %v859, %v829
        %v861 = vadd.f32 %v860, %v830
        %v862 = vadd.f32 %v861, %v831
        %v863 = vadd.f32 %v862, %v832
        %v864 = vrot.slane %v863, 4
        %v865 = vadd.f32 %v863, %v864
        %v866 = vrot.slane %v865, 2
        %v867 = vadd.f32 %v865, %v866
        %v868 = vrot.slane %v867, 1
        %v869 = vadd.f32 %v867, %v868
        %870 = vst [vmem:[%s246] sm:$0x1] %v869
        %s871 = sand.u32 %s81, 1
        %s872 = scalar_lea.sflag [#allocation4], %s871
        %s873 = sand.u32 %s81, 1
        %s874 = smul.addr %s873, 128
        %s875 = scalar_lea.vmem [#allocation7], %s874
        %s876 = sand.u32 %s26, 1
        %s877 = scalar_lea.sflag [#allocation9], %s876
        %s878 = sand.u32 %s107, 1
        %s879 = scalar_lea.vmem [#allocation8], %s878
        %s880 = sand.u32 %s26, 1
        %s881 = scalar_lea.sflag [#allocation9], %s880
        %s882 = sand.u32 %s133, 1
        %s883 = scalar_lea.vmem [#allocation10], %s882
        // Predicated region
        $region37: #{tpu_custom_call.1} parent=27 // pred_check
          %p884 = pneg %p91
        $region38: #{tpu_custom_call.1} parent=27 // pred_check_branch
          %886 = sbr.rel (%p884) target = $region40
        $region39: #{tpu_custom_call.1} parent=27 // pred_region
          %s887 = smul.u32 32, %s26
          %s889 = ssub.s32 2048, 2048
          %890 = vsyncadd %s872, %s889
          %s891 = smul.addr %s887, 64
          %s892 = scalar_lea.hbm %s2, %s891
          %s893 = sshll.u32 %s875, 4
          %s894 = int_to_ptr.vmem [resolvable:$true] %s893
          %899 = dma.vmem_to_hbm [thread:$0]  %s894, 2048, %s892, %s872, 64, 64, 4
        $region40: #{tpu_custom_call.1} parent=27 // pred_fallthru
          _
        // Predicated region
        $region41: #{tpu_custom_call.1} parent=27 // pred_check
          %p900 = pneg %p117
        $region42: #{tpu_custom_call.1} parent=27 // pred_check_branch
          %902 = sbr.rel (%p900) target = $region44
        $region43: #{tpu_custom_call.1} parent=27 // pred_region
          %s904 = ssub.s32 16, 16
          %905 = vsyncadd %s877, %s904
          %s906 = smul.addr %s26, 16
          %s907 = scalar_lea.hbm %s3, %s906
          %s909 = sshll.u32 %s879, 4
          %s910 = int_to_ptr.vmem [resolvable:$true] %s909
          %912 = dma.vmem_to_hbm [thread:$0]  %s910, 16, %s907, %s877
        $region44: #{tpu_custom_call.1} parent=27 // pred_fallthru
          _
        // Predicated region
        $region45: #{tpu_custom_call.1} parent=27 // pred_check
          %p913 = pneg %p143
        $region46: #{tpu_custom_call.1} parent=27 // pred_check_branch
          %915 = sbr.rel (%p913) target = $region48
        $region47: #{tpu_custom_call.1} parent=27 // pred_region
          %s917 = ssub.s32 16, 16
          %918 = vsyncadd %s881, %s917
          %s919 = smul.addr %s26, 16
          %s920 = scalar_lea.hbm %s4, %s919
          %s922 = sshll.u32 %s883, 4
          %s923 = int_to_ptr.vmem [resolvable:$true] %s922
          %925 = dma.vmem_to_hbm [thread:$0]  %s923, 16, %s920, %s881
        $region48: #{tpu_custom_call.1} parent=27 // pred_fallthru
          _
      $region28: #{tpu_custom_call.1} parent=5 // pred_fallthru
        _
      %p926 = scmp.le.s32.totalorder 2, %s21
      // Predicated region
      $region49: #{tpu_custom_call.1} parent=5 // pred_check
        %p927 = pneg %p926
      $region50: #{tpu_custom_call.1} parent=5 // pred_check_branch
        %929 = sbr.rel (%p927) target = $region52
      $region51: #{tpu_custom_call.1} parent=5 // pred_region
        %s930 = ssub.s32 %s21, 2
        // Predicated region
        $region53: #{tpu_custom_call.1} parent=51 // pred_check
          %p931 = pneg %p97
        $region54: #{tpu_custom_call.1} parent=51 // pred_check_branch
          %933 = sbr.rel (%p931) target = $region56
        $region55: #{tpu_custom_call.1} parent=51 // pred_region
          %s934 = sand.u32 %s82, 1
          %s935 = scalar_lea.sflag [#allocation4], %s934
          %s936 = sand.u32 %s82, 1
          %s937 = smul.addr %s936, 128
          %s938 = scalar_lea.vmem [#allocation7], %s937
          %939 = dma.done %s935, 2048
        $region56: #{tpu_custom_call.1} parent=51 // pred_fallthru
          _
        // Predicated region
        $region57: #{tpu_custom_call.1} parent=51 // pred_check
          %p940 = pneg %p123
        $region58: #{tpu_custom_call.1} parent=51 // pred_check_branch
          %942 = sbr.rel (%p940) target = $region60
        $region59: #{tpu_custom_call.1} parent=51 // pred_region
          %s943 = sand.u32 %s27, 1
          %s944 = scalar_lea.sflag [#allocation9], %s943
          %s945 = sand.u32 %s108, 1
          %s946 = scalar_lea.vmem [#allocation8], %s945
          %947 = dma.done %s944, 16
        $region60: #{tpu_custom_call.1} parent=51 // pred_fallthru
          _
        // Predicated region
        $region61: #{tpu_custom_call.1} parent=51 // pred_check
          %p948 = pneg %p149
        $region62: #{tpu_custom_call.1} parent=51 // pred_check_branch
          %950 = sbr.rel (%p948) target = $region64
        $region63: #{tpu_custom_call.1} parent=51 // pred_region
          %s951 = sand.u32 %s27, 1
          %s952 = scalar_lea.sflag [#allocation9], %s951
          %s953 = sand.u32 %s134, 1
          %s954 = scalar_lea.vmem [#allocation10], %s953
          %955 = dma.done %s952, 16
        $region64: #{tpu_custom_call.1} parent=51 // pred_fallthru
          _
      $region52: #{tpu_custom_call.1} parent=5 // pred_fallthru
        _
    $region6: #{tpu_custom_call.1} parent=1 // loop_footer
      %s25 = sadd.s32 1, %s21
    $region7: #{tpu_custom_call.1} parent=1 // loop_footer_branch
      %20 = sbr.rel target = $region3
    $region8: #{tpu_custom_call.1} parent=1 // loop_exit
      _
    %956 = vsyncpa [#allocation3], 1
    %s957 = scalar_lea.sflag [#allocation3], 1
    %958 = vsyncpa %s957, 1
    %959 = vsyncpa [#allocation6], 1
    %960 = vsyncpa [#allocation4], 1
    %s961 = scalar_lea.sflag [#allocation4], 1
    %962 = vsyncpa %s961, 1
    %963 = vsyncpa [#allocation9], 1
    %s964 = scalar_lea.sflag [#allocation9], 1
    %965 = vsyncpa %s964, 1

</llo_original>
